<compile_context>
chip_gen: v7x
topology: tpu7x:2x2x1
jax: 0.10.0
libtpu: 0.0.40
codegen_flags: <defaults>
</compile_context>

<pallas_src>
import functools

import jax
import jax.numpy as jnp
from jax.experimental import pallas as pl
from jax.experimental.pallas import tpu as pltpu

LN_EPS = 1e-5
LEAKY_SLOPE = 0.2
LANE = 128


def _round_up(n, m):
    return ((n + m - 1) // m) * m


# ---------------------------------------------------------------------------
# Fused kernel: unrolls the (static) hidden layers + mean/var heads.
# Refs: x [Bt, Dp] bf16, w_slab [L, Dp, Dp] bf16, bgb_slab [L, 8, Dp] f32,
#       mean_out [Bt, Dp] f32, var_out [Bt, Dp] f32
# ---------------------------------------------------------------------------
def _make_kernel(n_hidden, true_dims):
    def kernel(x_ref, w_ref, bgb_ref, mean_ref, var_ref):
        x = x_ref[...]                                      # [Bt, Dp] bf16
        for i in range(n_hidden):
            w = w_ref[i]                                    # [Dp, Dp] bf16 (static slab index)
            bgb = bgb_ref[i]                                # [8, Dp] f32

            # Linear (MXU, f32 accumulation)
            y = jnp.dot(x, w, preferred_element_type=jnp.float32) + bgb[0:1, :]

            # LayerNorm over the *logical* width: padding lanes of y are exactly
            # zero, so plain sums are correct with the true divisor.
            inv_d = 1.0 / float(true_dims[i])
            mu = jnp.sum(y, axis=-1, keepdims=True) * inv_d
            ex2 = jnp.sum(y * y, axis=-1, keepdims=True) * inv_d
            var = jnp.maximum(ex2 - mu * mu, 0.0)
            yn = (y - mu) * jax.lax.rsqrt(var + LN_EPS)
            yn = yn * bgb[1:2, :] + bgb[2:3, :]             # gamma/beta pads = 0 -> pads stay 0

            # LeakyReLU(0.2); Dropout(p=0.2) is identity in eval mode.
            act = jnp.where(yn >= 0, yn, LEAKY_SLOPE * yn)
            x = act.astype(jnp.bfloat16)

        # mean / var heads: separate lane-dense outputs (pad lanes -> 0).
        mean_ref[...] = (
            jnp.dot(x, w_ref[n_hidden], preferred_element_type=jnp.float32)
            + bgb_ref[n_hidden][0:1, :]
        )
        var_ref[...] = (
            jnp.dot(x, w_ref[n_hidden + 1], preferred_element_type=jnp.float32)
            + bgb_ref[n_hidden + 1][0:1, :]
        )

    return kernel


# ---------------------------------------------------------------------------
# Parameter packing: logical params -> two lane-dense slabs (done once).
# ---------------------------------------------------------------------------
def pack_params(params, layers):
    dp = max(LANE, _round_up(max(layers), LANE))
    n_hidden = len(layers) - 2

    def pad_w(w):
        return jnp.pad(w, ((0, dp - w.shape[0]), (0, dp - w.shape[1])))

    w_tiles, bgb_tiles = [], []
    for (w, b), (g, beta) in zip(params["fc"], params["ln"]):
        d = w.shape[1]
        bgb = jnp.zeros((8, dp), jnp.float32)
        bgb = bgb.at[0, :d].set(b[0]).at[1, :d].set(g[0]).at[2, :d].set(beta[0])
        w_tiles.append(pad_w(w))
        bgb_tiles.append(bgb)
    for name in ("mean", "var"):
        w, b = params[name]
        d = w.shape[1]
        bgb = jnp.zeros((8, dp), jnp.float32).at[0, :d].set(b[0])
        w_tiles.append(pad_w(w))
        bgb_tiles.append(bgb)

    w_slab = jnp.stack(w_tiles).astype(jnp.bfloat16)        # [L, Dp, Dp]
    bgb_slab = jnp.stack(bgb_tiles)                         # [L, 8, Dp] f32
    true_dims = tuple(int(d) for d in layers[1:1 + n_hidden])
    return w_slab, bgb_slab, true_dims, int(layers[-1])


@functools.partial(jax.jit, static_argnames=("true_dims", "d_out", "b_tile"))
def condition_encoder_forward(x, w_slab, bgb_slab, *, true_dims, d_out, b_tile=8):
    B, d0 = x.shape
    n_layers, dp, _ = w_slab.shape
    n_hidden = n_layers - 2

    # Pad batch to the tile and features to the lane-dense width; cast to bf16.
    bp = _round_up(B, b_tile)
    xp = jnp.zeros((bp, dp), jnp.bfloat16).at[:B, :d0].set(x.astype(jnp.bfloat16))

    flops = 2 * bp * dp * dp * n_layers
    bytes_accessed = (xp.size * 2 + w_slab.size * 2 + bgb_slab.size * 4
                      + 2 * bp * dp * 4)

    mean_p, var_p = pl.pallas_call(
        _make_kernel(n_hidden, true_dims),
        out_shape=(
            jax.ShapeDtypeStruct((bp, dp), jnp.float32),
            jax.ShapeDtypeStruct((bp, dp), jnp.float32),
        ),
        grid_spec=pltpu.PrefetchScalarGridSpec(
            num_scalar_prefetch=0,
            grid=(bp // b_tile,),
            in_specs=[
                pl.BlockSpec((b_tile, dp), lambda b: (b, 0)),          # activations stream
                pl.BlockSpec((n_layers, dp, dp), lambda b: (0, 0, 0)),  # weights resident
                pl.BlockSpec((n_layers, 8, dp), lambda b: (0, 0, 0)),   # bias/gamma/beta resident
            ],
            out_specs=(
                pl.BlockSpec((b_tile, dp), lambda b: (b, 0)),
                pl.BlockSpec((b_tile, dp), lambda b: (b, 0)),
            ),
        ),
        compiler_params=pltpu.CompilerParams(
            dimension_semantics=("parallel",)),
        cost_estimate=pl.CostEstimate(
            flops=flops,
            transcendentals=bp * n_hidden,
            bytes_accessed=bytes_accessed),
    )(xp, w_slab, bgb_slab)

    return mean_p[:B, :d_out], var_p[:B, :d_out]


# ---------------------------------------------------------------------------
# Parameter init (deterministic, PyTorch-nn.Linear-style uniform bounds).
# ---------------------------------------------------------------------------
def init_params(key, layers):
    params = {"fc": [], "ln": []}
    n_hidden = len(layers) - 2
    keys = jax.random.split(key, 2 * n_hidden + 4)
    k_idx = 0
    for i in range(n_hidden):
        fan_in, fan_out = layers[i], layers[i + 1]
        bound = 1.0 / (fan_in ** 0.5)
        w = jax.random.uniform(keys[k_idx], (fan_in, fan_out),
                               minval=-bound, maxval=bound, dtype=jnp.float32)
        b = jax.random.uniform(keys[k_idx + 1], (1, fan_out),
                               minval=-bound, maxval=bound, dtype=jnp.float32)
        k_idx += 2
        params["fc"].append((w, b))
        # nn.LayerNorm default: weight=1, bias=0
        params["ln"].append((jnp.ones((1, fan_out), jnp.float32),
                             jnp.zeros((1, fan_out), jnp.float32)))
    fan_in, fan_out = layers[-2], layers[-1]
    bound = 1.0 / (fan_in ** 0.5)
    params["mean"] = (
        jax.random.uniform(keys[k_idx], (fan_in, fan_out),
                           minval=-bound, maxval=bound, dtype=jnp.float32),
        jax.random.uniform(keys[k_idx + 1], (1, fan_out),
                           minval=-bound, maxval=bound, dtype=jnp.float32),
    )
    params["var"] = (
        jax.random.uniform(keys[k_idx + 2], (fan_in, fan_out),
                           minval=-bound, maxval=bound, dtype=jnp.float32),
        jax.random.uniform(keys[k_idx + 3], (1, fan_out),
                           minval=-bound, maxval=bound, dtype=jnp.float32),
    )
    return params


# Pure-JAX f32 reference for a correctness sanity check (kernel uses bf16
# operands on the MXU, so the comparison is tolerance-based).
def reference_forward(x, params):
    for (w, b), (g, beta) in zip(params["fc"], params["ln"]):
        y = x @ w + b
        mu = jnp.mean(y, axis=-1, keepdims=True)
        var = jnp.mean((y - mu) ** 2, axis=-1, keepdims=True)
        y = (y - mu) / jnp.sqrt(var + LN_EPS) * g + beta
        x = jnp.where(y >= 0, y, LEAKY_SLOPE * y)
    wm, bm = params["mean"]
    wv, bv = params["var"]
    return x @ wm + bm, x @ wv + bv


if __name__ == "__main__":
    # Small shapes consistent with the module: an MLP over feature vectors.
    layers = [32, 64, 48, 16]   # 2 hidden (fc0/bn0, fc1/bn1) + mean/var heads
    batch = 8

    key = jax.random.PRNGKey(0)
    k_param, k_x = jax.random.split(key)
    params = init_params(k_param, layers)
    x = jax.random.normal(k_x, (batch, layers[0]), dtype=jnp.float32)

    w_slab, bgb_slab, true_dims, d_out = pack_params(params, layers)
    mean, var = condition_encoder_forward(
        x, w_slab, bgb_slab, true_dims=true_dims, d_out=d_out, b_tile=8)
    mean, var = jax.block_until_ready((mean, var))

    ref_mean, ref_var = reference_forward(x, params)
    assert mean.shape == (batch, layers[-1]) and var.shape == (batch, layers[-1])
    assert jnp.allclose(mean, ref_mean, atol=5e-2, rtol=5e-2), \
        float(jnp.max(jnp.abs(mean - ref_mean)))
    assert jnp.allclose(var, ref_var, atol=5e-2, rtol=5e-2), \
        float(jnp.max(jnp.abs(var - ref_var)))

    print("KERNEL_OK")
</pallas_src>

<mosaic_0001>
module attributes {stable_mosaic.version = 11 : i64} {
  func.func @kernel(%arg0: i32, %arg1: memref<8x128xbf16, #tpu.memory_space<vmem>>, %arg2: memref<4x128x128xbf16, #tpu.memory_space<vmem>>, %arg3: memref<4x8x128xf32, #tpu.memory_space<vmem>>, %arg4: memref<8x128xf32, #tpu.memory_space<vmem>>, %arg5: memref<8x128xf32, #tpu.memory_space<vmem>>) attributes {dimension_semantics = [#tpu.dimension_semantics<parallel>], iteration_bounds = array<i64: 1>, scalar_prefetch = 0 : i64, scratch_operands = 0 : i64, tpu.core_type = #tpu.core_type<tc>, window_params = [{transform_indices = @transform_0, window_bounds = array<i64: 8, 128>}, {pipeline_mode = #tpu.pipeline_mode<synchronous>, transform_indices = @transform_1, window_bounds = array<i64: 4, 128, 128>}, {pipeline_mode = #tpu.pipeline_mode<synchronous>, transform_indices = @transform_2, window_bounds = array<i64: 4, 8, 128>}, {transform_indices = @transform_3, window_bounds = array<i64: 8, 128>}, {transform_indices = @transform_4, window_bounds = array<i64: 8, 128>}]} {
    %c0 = arith.constant 0 : index
    %c0_0 = arith.constant 0 : index
    %0 = vector.load %arg1[%c0, %c0_0] : memref<8x128xbf16, #tpu.memory_space<vmem>>, vector<8x128xbf16>
    %c0_1 = arith.constant 0 : index
    %c0_2 = arith.constant 0 : index
    %c0_3 = arith.constant 0 : index
    %1 = vector.load %arg2[%c0_1, %c0_2, %c0_3] : memref<4x128x128xbf16, #tpu.memory_space<vmem>>, vector<1x128x128xbf16>
    %2 = vector.shape_cast %1 : vector<1x128x128xbf16> to vector<128x128xbf16>
    %c0_4 = arith.constant 0 : index
    %c0_5 = arith.constant 0 : index
    %c0_6 = arith.constant 0 : index
    %3 = vector.load %arg3[%c0_4, %c0_5, %c0_6] : memref<4x8x128xf32, #tpu.memory_space<vmem>>, vector<1x8x128xf32>
    %4 = vector.shape_cast %3 : vector<1x8x128xf32> to vector<8x128xf32>
    %cst = arith.constant dense<0.000000e+00> : vector<8x128xf32>
    %5 = tpu.matmul %0, %2, %cst {dimension_numbers = #tpu.dot_dimension_numbers<[1], [0], [0], [1], [0, 0, 1, 1], [], []>} : vector<8x128xbf16>, vector<128x128xbf16>, vector<8x128xf32> -> vector<8x128xf32>
    %6 = vector.extract_strided_slice %4 {offsets = [0, 0], sizes = [1, 128], strides = [1, 1]} : vector<8x128xf32> to vector<1x128xf32>
    %7 = vector.broadcast %6 : vector<1x128xf32> to vector<8x128xf32>
    %8 = arith.addf %5, %7 : vector<8x128xf32>
    %cst_7 = arith.constant dense<0.000000e+00> : vector<8xf32>
    %9 = vector.multi_reduction <add>, %8, %cst_7 [1] : vector<8x128xf32> to vector<8xf32>
    %10 = vector.shape_cast %9 : vector<8xf32> to vector<8x1xf32>
    %cst_8 = arith.constant 1.562500e-02 : f32
    %11 = vector.broadcast %cst_8 : f32 to vector<8x1xf32>
    %12 = arith.mulf %10, %11 : vector<8x1xf32>
    %13 = arith.mulf %8, %8 : vector<8x128xf32>
    %cst_9 = arith.constant dense<0.000000e+00> : vector<8xf32>
    %14 = vector.multi_reduction <add>, %13, %cst_9 [1] : vector<8x128xf32> to vector<8xf32>
    %15 = vector.shape_cast %14 : vector<8xf32> to vector<8x1xf32>
    %cst_10 = arith.constant 1.562500e-02 : f32
    %16 = vector.broadcast %cst_10 : f32 to vector<8x1xf32>
    %17 = arith.mulf %15, %16 : vector<8x1xf32>
    %18 = arith.mulf %12, %12 : vector<8x1xf32>
    %19 = arith.subf %17, %18 : vector<8x1xf32>
    %cst_11 = arith.constant 0.000000e+00 : f32
    %20 = vector.broadcast %cst_11 : f32 to vector<8x1xf32>
    %21 = arith.maximumf %19, %20 : vector<8x1xf32>
    %22 = vector.broadcast %12 : vector<8x1xf32> to vector<8x128xf32>
    %23 = arith.subf %8, %22 : vector<8x128xf32>
    %cst_12 = arith.constant 9.99999974E-6 : f32
    %24 = vector.broadcast %cst_12 : f32 to vector<8x1xf32>
    %25 = arith.addf %21, %24 : vector<8x1xf32>
    %26 = math.rsqrt %25 : vector<8x1xf32>
    %27 = vector.broadcast %26 : vector<8x1xf32> to vector<8x128xf32>
    %28 = arith.mulf %23, %27 : vector<8x128xf32>
    %29 = vector.extract_strided_slice %4 {offsets = [1, 0], sizes = [1, 128], strides = [1, 1]} : vector<8x128xf32> to vector<1x128xf32>
    %30 = vector.broadcast %29 : vector<1x128xf32> to vector<8x128xf32>
    %31 = arith.mulf %28, %30 : vector<8x128xf32>
    %32 = vector.extract_strided_slice %4 {offsets = [2, 0], sizes = [1, 128], strides = [1, 1]} : vector<8x128xf32> to vector<1x128xf32>
    %33 = vector.broadcast %32 : vector<1x128xf32> to vector<8x128xf32>
    %34 = arith.addf %31, %33 : vector<8x128xf32>
    %cst_13 = arith.constant 0.000000e+00 : f32
    %35 = vector.broadcast %cst_13 : f32 to vector<8x128xf32>
    %36 = arith.cmpf oge, %34, %35 : vector<8x128xf32>
    %cst_14 = arith.constant 2.000000e-01 : f32
    %37 = vector.broadcast %cst_14 : f32 to vector<8x128xf32>
    %38 = arith.mulf %37, %34 : vector<8x128xf32>
    %39 = arith.select %36, %34, %38 : vector<8x128xi1>, vector<8x128xf32>
    %40 = arith.truncf %39 : vector<8x128xf32> to vector<8x128xbf16>
    %c1 = arith.constant 1 : index
    %c0_15 = arith.constant 0 : index
    %c0_16 = arith.constant 0 : index
    %41 = vector.load %arg2[%c1, %c0_15, %c0_16] : memref<4x128x128xbf16, #tpu.memory_space<vmem>>, vector<1x128x128xbf16>
    %42 = vector.shape_cast %41 : vector<1x128x128xbf16> to vector<128x128xbf16>
    %c1_17 = arith.constant 1 : index
    %c0_18 = arith.constant 0 : index
    %c0_19 = arith.constant 0 : index
    %43 = vector.load %arg3[%c1_17, %c0_18, %c0_19] : memref<4x8x128xf32, #tpu.memory_space<vmem>>, vector<1x8x128xf32>
    %44 = vector.shape_cast %43 : vector<1x8x128xf32> to vector<8x128xf32>
    %cst_20 = arith.constant dense<0.000000e+00> : vector<8x128xf32>
    %45 = tpu.matmul %40, %42, %cst_20 {dimension_numbers = #tpu.dot_dimension_numbers<[1], [0], [0], [1], [0, 0, 1, 1], [], []>} : vector<8x128xbf16>, vector<128x128xbf16>, vector<8x128xf32> -> vector<8x128xf32>
    %46 = vector.extract_strided_slice %44 {offsets = [0, 0], sizes = [1, 128], strides = [1, 1]} : vector<8x128xf32> to vector<1x128xf32>
    %47 = vector.broadcast %46 : vector<1x128xf32> to vector<8x128xf32>
    %48 = arith.addf %45, %47 : vector<8x128xf32>
    %cst_21 = arith.constant dense<0.000000e+00> : vector<8xf32>
    %49 = vector.multi_reduction <add>, %48, %cst_21 [1] : vector<8x128xf32> to vector<8xf32>
    %50 = vector.shape_cast %49 : vector<8xf32> to vector<8x1xf32>
    %cst_22 = arith.constant 0.020833334 : f32
    %51 = vector.broadcast %cst_22 : f32 to vector<8x1xf32>
    %52 = arith.mulf %50, %51 : vector<8x1xf32>
    %53 = arith.mulf %48, %48 : vector<8x128xf32>
    %cst_23 = arith.constant dense<0.000000e+00> : vector<8xf32>
    %54 = vector.multi_reduction <add>, %53, %cst_23 [1] : vector<8x128xf32> to vector<8xf32>
    %55 = vector.shape_cast %54 : vector<8xf32> to vector<8x1xf32>
    %cst_24 = arith.constant 0.020833334 : f32
    %56 = vector.broadcast %cst_24 : f32 to vector<8x1xf32>
    %57 = arith.mulf %55, %56 : vector<8x1xf32>
    %58 = arith.mulf %52, %52 : vector<8x1xf32>
    %59 = arith.subf %57, %58 : vector<8x1xf32>
    %cst_25 = arith.constant 0.000000e+00 : f32
    %60 = vector.broadcast %cst_25 : f32 to vector<8x1xf32>
    %61 = arith.maximumf %59, %60 : vector<8x1xf32>
    %62 = vector.broadcast %52 : vector<8x1xf32> to vector<8x128xf32>
    %63 = arith.subf %48, %62 : vector<8x128xf32>
    %cst_26 = arith.constant 9.99999974E-6 : f32
    %64 = vector.broadcast %cst_26 : f32 to vector<8x1xf32>
    %65 = arith.addf %61, %64 : vector<8x1xf32>
    %66 = math.rsqrt %65 : vector<8x1xf32>
    %67 = vector.broadcast %66 : vector<8x1xf32> to vector<8x128xf32>
    %68 = arith.mulf %63, %67 : vector<8x128xf32>
    %69 = vector.extract_strided_slice %44 {offsets = [1, 0], sizes = [1, 128], strides = [1, 1]} : vector<8x128xf32> to vector<1x128xf32>
    %70 = vector.broadcast %69 : vector<1x128xf32> to vector<8x128xf32>
    %71 = arith.mulf %68, %70 : vector<8x128xf32>
    %72 = vector.extract_strided_slice %44 {offsets = [2, 0], sizes = [1, 128], strides = [1, 1]} : vector<8x128xf32> to vector<1x128xf32>
    %73 = vector.broadcast %72 : vector<1x128xf32> to vector<8x128xf32>
    %74 = arith.addf %71, %73 : vector<8x128xf32>
    %cst_27 = arith.constant 0.000000e+00 : f32
    %75 = vector.broadcast %cst_27 : f32 to vector<8x128xf32>
    %76 = arith.cmpf oge, %74, %75 : vector<8x128xf32>
    %cst_28 = arith.constant 2.000000e-01 : f32
    %77 = vector.broadcast %cst_28 : f32 to vector<8x128xf32>
    %78 = arith.mulf %77, %74 : vector<8x128xf32>
    %79 = arith.select %76, %74, %78 : vector<8x128xi1>, vector<8x128xf32>
    %80 = arith.truncf %79 : vector<8x128xf32> to vector<8x128xbf16>
    %c2 = arith.constant 2 : index
    %c0_29 = arith.constant 0 : index
    %c0_30 = arith.constant 0 : index
    %81 = vector.load %arg2[%c2, %c0_29, %c0_30] : memref<4x128x128xbf16, #tpu.memory_space<vmem>>, vector<1x128x128xbf16>
    %82 = vector.shape_cast %81 : vector<1x128x128xbf16> to vector<128x128xbf16>
    %cst_31 = arith.constant dense<0.000000e+00> : vector<8x128xf32>
    %83 = tpu.matmul %80, %82, %cst_31 {dimension_numbers = #tpu.dot_dimension_numbers<[1], [0], [0], [1], [0, 0, 1, 1], [], []>} : vector<8x128xbf16>, vector<128x128xbf16>, vector<8x128xf32> -> vector<8x128xf32>
    %c2_32 = arith.constant 2 : index
    %c0_33 = arith.constant 0 : index
    %c0_34 = arith.constant 0 : index
    %84 = vector.load %arg3[%c2_32, %c0_33, %c0_34] : memref<4x8x128xf32, #tpu.memory_space<vmem>>, vector<1x8x128xf32>
    %85 = vector.shape_cast %84 : vector<1x8x128xf32> to vector<8x128xf32>
    %86 = vector.extract_strided_slice %85 {offsets = [0, 0], sizes = [1, 128], strides = [1, 1]} : vector<8x128xf32> to vector<1x128xf32>
    %87 = vector.broadcast %86 : vector<1x128xf32> to vector<8x128xf32>
    %88 = arith.addf %83, %87 : vector<8x128xf32>
    %c0_35 = arith.constant 0 : index
    %c0_36 = arith.constant 0 : index
    %89 = vector.load %arg4[%c0_35, %c0_36] : memref<8x128xf32, #tpu.memory_space<vmem>>, vector<8x128xf32>
    tpu.vector_store %arg4[%c0_35, %c0_36], %88 {strides = array<i32>} : memref<8x128xf32, #tpu.memory_space<vmem>>, vector<8x128xf32>,
    %c3 = arith.constant 3 : index
    %c0_37 = arith.constant 0 : index
    %c0_38 = arith.constant 0 : index
    %90 = vector.load %arg2[%c3, %c0_37, %c0_38] : memref<4x128x128xbf16, #tpu.memory_space<vmem>>, vector<1x128x128xbf16>
    %91 = vector.shape_cast %90 : vector<1x128x128xbf16> to vector<128x128xbf16>
    %cst_39 = arith.constant dense<0.000000e+00> : vector<8x128xf32>
    %92 = tpu.matmul %80, %91, %cst_39 {dimension_numbers = #tpu.dot_dimension_numbers<[1], [0], [0], [1], [0, 0, 1, 1], [], []>} : vector<8x128xbf16>, vector<128x128xbf16>, vector<8x128xf32> -> vector<8x128xf32>
    %c3_40 = arith.constant 3 : index
    %c0_41 = arith.constant 0 : index
    %c0_42 = arith.constant 0 : index
    %93 = vector.load %arg3[%c3_40, %c0_41, %c0_42] : memref<4x8x128xf32, #tpu.memory_space<vmem>>, vector<1x8x128xf32>
    %94 = vector.shape_cast %93 : vector<1x8x128xf32> to vector<8x128xf32>
    %95 = vector.extract_strided_slice %94 {offsets = [0, 0], sizes = [1, 128], strides = [1, 1]} : vector<8x128xf32> to vector<1x128xf32>
    %96 = vector.broadcast %95 : vector<1x128xf32> to vector<8x128xf32>
    %97 = arith.addf %92, %96 : vector<8x128xf32>
    %c0_43 = arith.constant 0 : index
    %c0_44 = arith.constant 0 : index
    %98 = vector.load %arg5[%c0_43, %c0_44] : memref<8x128xf32, #tpu.memory_space<vmem>>, vector<8x128xf32>
    tpu.vector_store %arg5[%c0_43, %c0_44], %97 {strides = array<i32>} : memref<8x128xf32, #tpu.memory_space<vmem>>, vector<8x128xf32>,
    return
  }
  func.func @transform_0(%arg0: i32) -> (i32, i32) {
    %c0_i32 = arith.constant 0 : i32
    %c0_i32_0 = arith.constant 0 : i32
    return %arg0, %c0_i32 : i32, i32
  }
  func.func @transform_1(%arg0: i32) -> (i32, i32, i32) {
    %c0_i32 = arith.constant 0 : i32
    %c0_i32_0 = arith.constant 0 : i32
    %c0_i32_1 = arith.constant 0 : i32
    %c0_i32_2 = arith.constant 0 : i32
    return %c0_i32, %c0_i32_0, %c0_i32_1 : i32, i32, i32
  }
  func.func @transform_2(%arg0: i32) -> (i32, i32, i32) {
    %c0_i32 = arith.constant 0 : i32
    %c0_i32_0 = arith.constant 0 : i32
    %c0_i32_1 = arith.constant 0 : i32
    %c0_i32_2 = arith.constant 0 : i32
    return %c0_i32, %c0_i32_0, %c0_i32_1 : i32, i32, i32
  }
  func.func @transform_3(%arg0: i32) -> (i32, i32) {
    %c0_i32 = arith.constant 0 : i32
    %c0_i32_0 = arith.constant 0 : i32
    return %arg0, %c0_i32 : i32, i32
  }
  func.func @transform_4(%arg0: i32) -> (i32, i32) {
    %c0_i32 = arith.constant 0 : i32
    %c0_i32_0 = arith.constant 0 : i32
    return %arg0, %c0_i32 : i32, i32
  }
}

</mosaic_0001>

<llo_original>
// kernel: condition_encoder_forward.1
$region0: #{condition_encoder_forward.1}
  #allocation0 [shape = 'u32[]', space=smem, size = 0x4, offset = 0x4, fixed_abs, tag = 'smem constant byte address 0x4 - core index']
  #allocation1 [shape = 'u32[144,128]{1,0:T(1,128)}', space=vmem, size = 0x12000, scoped, tag = 'internal scratch']
  %s0 = inlined_call_operand.vmem [shape: bf16[8,128], index: 0, kind: input, shape index: {}]
  %s1 = inlined_call_operand.hbm [shape: bf16[4,128,128], index: 1, kind: input, shape index: {}]
  %s2 = inlined_call_operand.vmem [shape: f32[4,8,128], index: 2, kind: input, shape index: {}]
  %s3 = inlined_call_operand.hbm [shape: f32[8,128], index: 3, kind: output, shape index: {0}]
  %s4 = inlined_call_operand.hbm [shape: f32[8,128], index: 4, kind: output, shape index: {1}]
  %5 = xla_tuple %s3, %s4
  %s6 = sld [smem:[#allocation0]]
  $region34: #{condition_encoder_forward.1} parent=0
    _
  %s8 = ssub.s32 1, %s6
  %s9 = scalar_select 0, %s8, %s6
  $region1: #{condition_encoder_forward.1} parent=0
    #allocation2 [shape = 'u8[131072]{0}', space=vmem, size = 0x20000, scoped, tag = 'input window, operand 1, single buffered']
    #allocation3 [shape = 's32[1]{0}', space=sflag, size = 0x4, scoped, tag = 'scoped memory for condition_encoder_forward.1']
    #allocation4 [shape = 's32[1]{0}', space=sflag, size = 0x4, scoped, tag = 'scoped memory for condition_encoder_forward.1']
    #allocation5 [shape = 'u8[4096]{0}', space=vmem, size = 0x1000, scoped, tag = 'output window, operand 0, single buffered']
    #allocation6 [shape = 'u8[4096]{0}', space=vmem, size = 0x1000, scoped, tag = 'output window, operand 1, single buffered']
    #allocation7 [shape = 's32[1]{0}', space=sflag, size = 0x4, scoped, tag = 'scoped memory for condition_encoder_forward.1']
    %10 = vsyncpa [#allocation3], 0
    %11 = vsyncpa [#allocation4], 0
    %12 = vsyncpa [#allocation7], 0
    // Predicated region
    $region2: #{condition_encoder_forward.1} parent=1 // pred_check
      _
    $region3: #{condition_encoder_forward.1} parent=1 // pred_check_branch
      %14 = sbr.rel (0) target = $region5
    $region4: #{condition_encoder_forward.1} parent=1 // pred_region
      _
    $region5: #{condition_encoder_forward.1} parent=1 // pred_fallthru
      _
    // Predicated region
    $region6: #{condition_encoder_forward.1} parent=1 // pred_check
      _
    $region7: #{condition_encoder_forward.1} parent=1 // pred_check_branch
      %16 = sbr.rel (0) target = $region9
    $region8: #{condition_encoder_forward.1} parent=1 // pred_region
      %s18 = ssub.s32 4096, 4096
      %19 = vsyncadd [#allocation3], %s18
      %s20 = sshll.u32 [#allocation2], 4
      %s21 = int_to_ptr.vmem [resolvable:$true] %s20
      %26 = dma.hbm_to_vmem [thread:$0]  %s1, 4096, %s21, [#allocation3], 64, 64, 4
    $region9: #{condition_encoder_forward.1} parent=1 // pred_fallthru
      _
    // Predicated region
    $region10: #{condition_encoder_forward.1} parent=1 // pred_check
      _
    $region11: #{condition_encoder_forward.1} parent=1 // pred_check_branch
      %28 = sbr.rel (0) target = $region13
    $region12: #{condition_encoder_forward.1} parent=1 // pred_region
      _
    $region13: #{condition_encoder_forward.1} parent=1 // pred_fallthru
      _
    // Predicated region
    $region14: #{condition_encoder_forward.1} parent=1 // pred_check
      _
    $region15: #{condition_encoder_forward.1} parent=1 // pred_check_branch
      %30 = sbr.rel (0) target = $region17
    $region16: #{condition_encoder_forward.1} parent=1 // pred_region
      %31 = dma.done [#allocation3], 4096
    $region17: #{condition_encoder_forward.1} parent=1 // pred_fallthru
      _
    %v33 = vld [vmem:[%s0] sm:$0xf]
    %v34 = vld [vmem:[#allocation2] sm:$0xf]
    %v35 = vld [vmem:[#allocation2 + $0x4] sm:$0xf]
    %v36 = vld [vmem:[#allocation2 + $0x8] sm:$0xf]
    %v37 = vld [vmem:[#allocation2 + $0xc] sm:$0xf]
    %v38 = vld [vmem:[#allocation2 + $0x10] sm:$0xf]
    %v39 = vld [vmem:[#allocation2 + $0x14] sm:$0xf]
    %v40 = vld [vmem:[#allocation2 + $0x18] sm:$0xf]
    %v41 = vld [vmem:[#allocation2 + $0x1c] sm:$0xf]
    %v42 = vld [vmem:[#allocation2 + $0x20] sm:$0xf]
    %v43 = vld [vmem:[#allocation2 + $0x24] sm:$0xf]
    %v44 = vld [vmem:[#allocation2 + $0x28] sm:$0xf]
    %v45 = vld [vmem:[#allocation2 + $0x2c] sm:$0xf]
    %v46 = vld [vmem:[#allocation2 + $0x30] sm:$0xf]
    %v47 = vld [vmem:[#allocation2 + $0x34] sm:$0xf]
    %v48 = vld [vmem:[#allocation2 + $0x38] sm:$0xf]
    %v49 = vld [vmem:[#allocation2 + $0x3c] sm:$0xf]
    %v50 = vld [vmem:[%s2] sm:$0xff]
    %v51 = vlaneseq
    %v52 = vshrl.u32 %v51, 7
    %v53 = vsub.s32 0, %v52
    %v54 = vrot.slane %v50, %v53
    %v71 = vunpack.c.l.b16 %v34
    %v72 = vunpack.c.l.b16 %v35
    %v73 = vunpack.c.l.b16 %v36
    %v74 = vunpack.c.l.b16 %v37
    %v75 = vunpack.c.l.b16 %v38
    %v76 = vunpack.c.l.b16 %v39
    %v77 = vunpack.c.l.b16 %v40
    %v78 = vunpack.c.l.b16 %v41
    %v79 = vunpack.c.l.b16 %v42
    %v80 = vunpack.c.l.b16 %v43
    %v81 = vunpack.c.l.b16 %v44
    %v82 = vunpack.c.l.b16 %v45
    %v83 = vunpack.c.l.b16 %v46
    %v84 = vunpack.c.l.b16 %v47
    %v85 = vunpack.c.l.b16 %v48
    %v86 = vunpack.c.l.b16 %v49
    %v87 = vpack.c.b16 %v72, %v71
    %v88 = vpack.c.b16 %v74, %v73
    %v89 = vpack.c.b16 %v76, %v75
    %v90 = vpack.c.b16 %v78, %v77
    %v91 = vpack.c.b16 %v80, %v79
    %v92 = vpack.c.b16 %v82, %v81
    %v93 = vpack.c.b16 %v84, %v83
    %v94 = vpack.c.b16 %v86, %v85
    %103 = vmatprep.subr.bf16.mxu0 0
    %104 = vmatpush1.bf16.msra.mxu0 %v87
    %105 = vmatprep.subr.bf16.mxu0 0
    %106 = vmatpush1.bf16.msra.mxu0 %v88
    %107 = vmatprep.subr.bf16.mxu0 0
    %108 = vmatpush1.bf16.msra.mxu0 %v89
    %109 = vmatprep.subr.bf16.mxu0 0
    %110 = vmatpush1.bf16.msra.mxu0 %v90
    %111 = vmatprep.subr.bf16.mxu0 0
    %112 = vmatpush1.bf16.msra.mxu0 %v91
    %113 = vmatprep.subr.bf16.mxu0 0
    %114 = vmatpush1.bf16.msra.mxu0 %v92
    %115 = vmatprep.subr.bf16.mxu0 0
    %116 = vmatpush1.bf16.msra.mxu0 %v93
    %117 = vmatprep.subr.bf16.mxu0 0
    %118 = vmatpush1.bf16.msra.mxu0 %v94
    %119 = vmatprep.subr.bf16.mxu0 0
    %120 = vmatpush1.bf16.msra.mxu0 0
    %121 = vmatprep.subr.bf16.mxu0 0
    %122 = vmatpush1.bf16.msra.mxu0 0
    %123 = vmatprep.subr.bf16.mxu0 0
    %124 = vmatpush1.bf16.msra.mxu0 0
    %125 = vmatprep.subr.bf16.mxu0 0
    %126 = vmatpush1.bf16.msra.mxu0 0
    %127 = vmatprep.subr.bf16.mxu0 0
    %128 = vmatpush1.bf16.msra.mxu0 0
    %129 = vmatprep.subr.bf16.mxu0 0
    %130 = vmatpush1.bf16.msra.mxu0 0
    %131 = vmatprep.subr.bf16.mxu0 0
    %132 = vmatpush1.bf16.msra.mxu0 0
    %133 = vmatprep.subr.bf16.mxu0 0
    %134 = vmatpush1.bf16.msra.mxu0 0
    %135 = vmatprep.mubr.bf16.mxu0 0
    %136 = vmatmul.mubr.bf16.gmra.mrb[0].mxu0 %v33
    %v137 = vpop.f32.mrb[0].mxu0
    %v138 = vadd.f32 %v54, %v137
    %v139 = vpop.f32.mrb[0].mxu0
    %v140 = vpop.f32.mrb[0].mxu0
    %v141 = vpop.f32.mrb[0].mxu0
    %142 = vdwg.mxu0
    %143 = vadd.xlane.f32.xlu0 %v138
    %v144 = vpop.xlane.xlu0 %143
    %v145 = vmul.f32 %v144, 0.015625
    %v146 = vmul.f32 %v138, %v138
    %147 = vadd.xlane.f32.xlu0 %v146
    %v148 = vpop.xlane.xlu0 %147
    %v149 = vmul.f32 %v148, 0.015625
    %v150 = vmul.f32 %v145, %v145
    %v151 = vsub.f32 %v149, %v150
    %v152 = vmax.f32 %v151, 0.0
    %v153 = vsub.f32 %v138, %v145
    %v154 = vadd.f32 %v152, 1e-05
    %v155 = vrsqrt.pop %v154
    %v156 = vmul.f32 %v153, %v155
    %v157 = vlaneseq
    %v158 = vshrl.u32 %v157, 7
    %v159 = vsub.s32 1, %v158
    %v160 = vrot.slane %v50, %v159
    %v161 = vmul.f32 %v156, %v160
    %v162 = vlaneseq
    %v163 = vshrl.u32 %v162, 7
    %v164 = vsub.s32 2, %v163
    %v165 = vrot.slane %v50, %v164
    %v166 = vadd.f32 %v161, %v165
    %vm167 = vcmp.ge.f32.partialorder %v166, 0.0
    %v168 = vmul.f32 %v166, 0.2
    %v169 = vsel %vm167, %v166, %v168
    %v170 = vpack.c.bf16 %v169, %v169
    %s171 = scalar_lea.vmem [#allocation2], 64
    %v172 = vld [vmem:[%s171] sm:$0xf]
    %v173 = vld [vmem:[%s171 + $0x4] sm:$0xf]
    %v174 = vld [vmem:[%s171 + $0x8] sm:$0xf]
    %v175 = vld [vmem:[%s171 + $0xc] sm:$0xf]
    %v176 = vld [vmem:[%s171 + $0x10] sm:$0xf]
    %v177 = vld [vmem:[%s171 + $0x14] sm:$0xf]
    %v178 = vld [vmem:[%s171 + $0x18] sm:$0xf]
    %v179 = vld [vmem:[%s171 + $0x1c] sm:$0xf]
    %v180 = vld [vmem:[%s171 + $0x20] sm:$0xf]
    %v181 = vld [vmem:[%s171 + $0x24] sm:$0xf]
    %v182 = vld [vmem:[%s171 + $0x28] sm:$0xf]
    %v183 = vld [vmem:[%s171 + $0x2c] sm:$0xf]
    %v184 = vld [vmem:[%s171 + $0x30] sm:$0xf]
    %v185 = vld [vmem:[%s171 + $0x34] sm:$0xf]
    %v186 = vld [vmem:[%s171 + $0x38] sm:$0xf]
    %v187 = vld [vmem:[%s171 + $0x3c] sm:$0xf]
    %s188 = scalar_lea.vmem %s2, 8
    %v189 = vld [vmem:[%s188] sm:$0xff]
    %v190 = vlaneseq
    %v191 = vshrl.u32 %v190, 7
    %v192 = vsub.s32 0, %v191
    %v193 = vrot.slane %v189, %v192
    %v210 = vunpack.c.l.b16 %v172
    %v211 = vunpack.c.l.b16 %v173
    %v212 = vunpack.c.l.b16 %v174
    %v213 = vunpack.c.l.b16 %v175
    %v214 = vunpack.c.l.b16 %v176
    %v215 = vunpack.c.l.b16 %v177
    %v216 = vunpack.c.l.b16 %v178
    %v217 = vunpack.c.l.b16 %v179
    %v218 = vunpack.c.l.b16 %v180
    %v219 = vunpack.c.l.b16 %v181
    %v220 = vunpack.c.l.b16 %v182
    %v221 = vunpack.c.l.b16 %v183
    %v222 = vunpack.c.l.b16 %v184
    %v223 = vunpack.c.l.b16 %v185
    %v224 = vunpack.c.l.b16 %v186
    %v225 = vunpack.c.l.b16 %v187
    %v226 = vpack.c.b16 %v211, %v210
    %v227 = vpack.c.b16 %v213, %v212
    %v228 = vpack.c.b16 %v215, %v214
    %v229 = vpack.c.b16 %v217, %v216
    %v230 = vpack.c.b16 %v219, %v218
    %v231 = vpack.c.b16 %v221, %v220
    %v232 = vpack.c.b16 %v223, %v222
    %v233 = vpack.c.b16 %v225, %v224
    %242 = vmatprep.subr.bf16.mxu0 0
    %243 = vmatpush1.bf16.msra.mxu0 %v226
    %244 = vmatprep.subr.bf16.mxu0 0
    %245 = vmatpush1.bf16.msra.mxu0 %v227
    %246 = vmatprep.subr.bf16.mxu0 0
    %247 = vmatpush1.bf16.msra.mxu0 %v228
    %248 = vmatprep.subr.bf16.mxu0 0
    %249 = vmatpush1.bf16.msra.mxu0 %v229
    %250 = vmatprep.subr.bf16.mxu0 0
    %251 = vmatpush1.bf16.msra.mxu0 %v230
    %252 = vmatprep.subr.bf16.mxu0 0
    %253 = vmatpush1.bf16.msra.mxu0 %v231
    %254 = vmatprep.subr.bf16.mxu0 0
    %255 = vmatpush1.bf16.msra.mxu0 %v232
    %256 = vmatprep.subr.bf16.mxu0 0
    %257 = vmatpush1.bf16.msra.mxu0 %v233
    %258 = vmatprep.subr.bf16.mxu0 0
    %259 = vmatpush1.bf16.msra.mxu0 0
    %260 = vmatprep.subr.bf16.mxu0 0
    %261 = vmatpush1.bf16.msra.mxu0 0
    %262 = vmatprep.subr.bf16.mxu0 0
    %263 = vmatpush1.bf16.msra.mxu0 0
    %264 = vmatprep.subr.bf16.mxu0 0
    %265 = vmatpush1.bf16.msra.mxu0 0
    %266 = vmatprep.subr.bf16.mxu0 0
    %267 = vmatpush1.bf16.msra.mxu0 0
    %268 = vmatprep.subr.bf16.mxu0 0
    %269 = vmatpush1.bf16.msra.mxu0 0
    %270 = vmatprep.subr.bf16.mxu0 0
    %271 = vmatpush1.bf16.msra.mxu0 0
    %272 = vmatprep.subr.bf16.mxu0 0
    %273 = vmatpush1.bf16.msra.mxu0 0
    %274 = vmatprep.mubr.bf16.mxu0 0
    %275 = vmatmul.mubr.bf16.gmra.mrb[0].mxu0 %v170
    %v276 = vpop.f32.mrb[0].mxu0
    %v277 = vadd.f32 %v193, %v276
    %v278 = vpop.f32.mrb[0].mxu0
    %v279 = vpop.f32.mrb[0].mxu0
    %v280 = vpop.f32.mrb[0].mxu0
    %281 = vdwg.mxu0
    %282 = vadd.xlane.f32.xlu0 %v277
    %v283 = vpop.xlane.xlu0 %282
    %v284 = vmul.f32 %v283, 0.020833334
    %v285 = vmul.f32 %v277, %v277
    %286 = vadd.xlane.f32.xlu0 %v285
    %v287 = vpop.xlane.xlu0 %286
    %v288 = vmul.f32 %v287, 0.020833334
    %v289 = vmul.f32 %v284, %v284
    %v290 = vsub.f32 %v288, %v289
    %v291 = vmax.f32 %v290, 0.0
    %v292 = vsub.f32 %v277, %v284
    %v293 = vadd.f32 %v291, 1e-05
    %v294 = vrsqrt.pop %v293
    %v295 = vmul.f32 %v292, %v294
    %v296 = vlaneseq
    %v297 = vshrl.u32 %v296, 7
    %v298 = vsub.s32 1, %v297
    %v299 = vrot.slane %v189, %v298
    %v300 = vmul.f32 %v295, %v299
    %v301 = vlaneseq
    %v302 = vshrl.u32 %v301, 7
    %v303 = vsub.s32 2, %v302
    %v304 = vrot.slane %v189, %v303
    %v305 = vadd.f32 %v300, %v304
    %vm306 = vcmp.ge.f32.partialorder %v305, 0.0
    %v307 = vmul.f32 %v305, 0.2
    %v308 = vsel %vm306, %v305, %v307
    %v309 = vpack.c.bf16 %v308, %v308
    %s310 = scalar_lea.vmem [#allocation2], 128
    %v311 = vld [vmem:[%s310] sm:$0xf]
    %v312 = vld [vmem:[%s310 + $0x4] sm:$0xf]
    %v313 = vld [vmem:[%s310 + $0x8] sm:$0xf]
    %v314 = vld [vmem:[%s310 + $0xc] sm:$0xf]
    %v315 = vld [vmem:[%s310 + $0x10] sm:$0xf]
    %v316 = vld [vmem:[%s310 + $0x14] sm:$0xf]
    %v317 = vld [vmem:[%s310 + $0x18] sm:$0xf]
    %v318 = vld [vmem:[%s310 + $0x1c] sm:$0xf]
    %v319 = vld [vmem:[%s310 + $0x20] sm:$0xf]
    %v320 = vld [vmem:[%s310 + $0x24] sm:$0xf]
    %v321 = vld [vmem:[%s310 + $0x28] sm:$0xf]
    %v322 = vld [vmem:[%s310 + $0x2c] sm:$0xf]
    %v323 = vld [vmem:[%s310 + $0x30] sm:$0xf]
    %v324 = vld [vmem:[%s310 + $0x34] sm:$0xf]
    %v325 = vld [vmem:[%s310 + $0x38] sm:$0xf]
    %v326 = vld [vmem:[%s310 + $0x3c] sm:$0xf]
    %s327 = scalar_lea.vmem %s2, 16
    %v328 = vld [vmem:[%s327] sm:$0xff]
    %v329 = vlaneseq
    %v330 = vshrl.u32 %v329, 7
    %v331 = vsub.s32 0, %v330
    %v332 = vrot.slane %v328, %v331
    %v349 = vunpack.c.l.b16 %v311
    %v350 = vunpack.c.l.b16 %v312
    %v351 = vunpack.c.l.b16 %v313
    %v352 = vunpack.c.l.b16 %v314
    %v353 = vunpack.c.l.b16 %v315
    %v354 = vunpack.c.l.b16 %v316
    %v355 = vunpack.c.l.b16 %v317
    %v356 = vunpack.c.l.b16 %v318
    %v357 = vunpack.c.l.b16 %v319
    %v358 = vunpack.c.l.b16 %v320
    %v359 = vunpack.c.l.b16 %v321
    %v360 = vunpack.c.l.b16 %v322
    %v361 = vunpack.c.l.b16 %v323
    %v362 = vunpack.c.l.b16 %v324
    %v363 = vunpack.c.l.b16 %v325
    %v364 = vunpack.c.l.b16 %v326
    %v365 = vpack.c.b16 %v350, %v349
    %v366 = vpack.c.b16 %v352, %v351
    %v367 = vpack.c.b16 %v354, %v353
    %v368 = vpack.c.b16 %v356, %v355
    %v369 = vpack.c.b16 %v358, %v357
    %v370 = vpack.c.b16 %v360, %v359
    %v371 = vpack.c.b16 %v362, %v361
    %v372 = vpack.c.b16 %v364, %v363
    %381 = vmatprep.subr.bf16.mxu0 0
    %382 = vmatpush1.bf16.msra.mxu0 %v365
    %383 = vmatprep.subr.bf16.mxu0 0
    %384 = vmatpush1.bf16.msra.mxu0 %v366
    %385 = vmatprep.subr.bf16.mxu0 0
    %386 = vmatpush1.bf16.msra.mxu0 %v367
    %387 = vmatprep.subr.bf16.mxu0 0
    %388 = vmatpush1.bf16.msra.mxu0 %v368
    %389 = vmatprep.subr.bf16.mxu0 0
    %390 = vmatpush1.bf16.msra.mxu0 %v369
    %391 = vmatprep.subr.bf16.mxu0 0
    %392 = vmatpush1.bf16.msra.mxu0 %v370
    %393 = vmatprep.subr.bf16.mxu0 0
    %394 = vmatpush1.bf16.msra.mxu0 %v371
    %395 = vmatprep.subr.bf16.mxu0 0
    %396 = vmatpush1.bf16.msra.mxu0 %v372
    %397 = vmatprep.subr.bf16.mxu0 0
    %398 = vmatpush1.bf16.msra.mxu0 0
    %399 = vmatprep.subr.bf16.mxu0 0
    %400 = vmatpush1.bf16.msra.mxu0 0
    %401 = vmatprep.subr.bf16.mxu0 0
    %402 = vmatpush1.bf16.msra.mxu0 0
    %403 = vmatprep.subr.bf16.mxu0 0
    %404 = vmatpush1.bf16.msra.mxu0 0
    %405 = vmatprep.subr.bf16.mxu0 0
    %406 = vmatpush1.bf16.msra.mxu0 0
    %407 = vmatprep.subr.bf16.mxu0 0
    %408 = vmatpush1.bf16.msra.mxu0 0
    %409 = vmatprep.subr.bf16.mxu0 0
    %410 = vmatpush1.bf16.msra.mxu0 0
    %411 = vmatprep.subr.bf16.mxu0 0
    %412 = vmatpush1.bf16.msra.mxu0 0
    %413 = vmatprep.mubr.bf16.mxu0 0
    %414 = vmatmul.mubr.bf16.gmra.mrb[0].mxu0 %v309
    %v415 = vpop.f32.mrb[0].mxu0
    %v416 = vadd.f32 %v332, %v415
    %v417 = vpop.f32.mrb[0].mxu0
    %v418 = vpop.f32.mrb[0].mxu0
    %v419 = vpop.f32.mrb[0].mxu0
    %420 = vdwg.mxu0
    %421 = vst [vmem:[#allocation5] sm:$0xff] %v416
    %s422 = scalar_lea.vmem [#allocation2], 192
    %v423 = vld [vmem:[%s422] sm:$0xf]
    %v424 = vld [vmem:[%s422 + $0x4] sm:$0xf]
    %v425 = vld [vmem:[%s422 + $0x8] sm:$0xf]
    %v426 = vld [vmem:[%s422 + $0xc] sm:$0xf]
    %v427 = vld [vmem:[%s422 + $0x10] sm:$0xf]
    %v428 = vld [vmem:[%s422 + $0x14] sm:$0xf]
    %v429 = vld [vmem:[%s422 + $0x18] sm:$0xf]
    %v430 = vld [vmem:[%s422 + $0x1c] sm:$0xf]
    %v431 = vld [vmem:[%s422 + $0x20] sm:$0xf]
    %v432 = vld [vmem:[%s422 + $0x24] sm:$0xf]
    %v433 = vld [vmem:[%s422 + $0x28] sm:$0xf]
    %v434 = vld [vmem:[%s422 + $0x2c] sm:$0xf]
    %v435 = vld [vmem:[%s422 + $0x30] sm:$0xf]
    %v436 = vld [vmem:[%s422 + $0x34] sm:$0xf]
    %v437 = vld [vmem:[%s422 + $0x38] sm:$0xf]
    %v438 = vld [vmem:[%s422 + $0x3c] sm:$0xf]
    %s439 = scalar_lea.vmem %s2, 24
    %v440 = vld [vmem:[%s439] sm:$0xff]
    %v441 = vlaneseq
    %v442 = vshrl.u32 %v441, 7
    %v443 = vsub.s32 0, %v442
    %v444 = vrot.slane %v440, %v443
    %v461 = vunpack.c.l.b16 %v423
    %v462 = vunpack.c.l.b16 %v424
    %v463 = vunpack.c.l.b16 %v425
    %v464 = vunpack.c.l.b16 %v426
    %v465 = vunpack.c.l.b16 %v427
    %v466 = vunpack.c.l.b16 %v428
    %v467 = vunpack.c.l.b16 %v429
    %v468 = vunpack.c.l.b16 %v430
    %v469 = vunpack.c.l.b16 %v431
    %v470 = vunpack.c.l.b16 %v432
    %v471 = vunpack.c.l.b16 %v433
    %v472 = vunpack.c.l.b16 %v434
    %v473 = vunpack.c.l.b16 %v435
    %v474 = vunpack.c.l.b16 %v436
    %v475 = vunpack.c.l.b16 %v437
    %v476 = vunpack.c.l.b16 %v438
    %v477 = vpack.c.b16 %v462, %v461
    %v478 = vpack.c.b16 %v464, %v463
    %v479 = vpack.c.b16 %v466, %v465
    %v480 = vpack.c.b16 %v468, %v467
    %v481 = vpack.c.b16 %v470, %v469
    %v482 = vpack.c.b16 %v472, %v471
    %v483 = vpack.c.b16 %v474, %v473
    %v484 = vpack.c.b16 %v476, %v475
    %493 = vmatprep.subr.bf16.mxu0 0
    %494 = vmatpush1.bf16.msra.mxu0 %v477
    %495 = vmatprep.subr.bf16.mxu0 0
    %496 = vmatpush1.bf16.msra.mxu0 %v478
    %497 = vmatprep.subr.bf16.mxu0 0
    %498 = vmatpush1.bf16.msra.mxu0 %v479
    %499 = vmatprep.subr.bf16.mxu0 0
    %500 = vmatpush1.bf16.msra.mxu0 %v480
    %501 = vmatprep.subr.bf16.mxu0 0
    %502 = vmatpush1.bf16.msra.mxu0 %v481
    %503 = vmatprep.subr.bf16.mxu0 0
    %504 = vmatpush1.bf16.msra.mxu0 %v482
    %505 = vmatprep.subr.bf16.mxu0 0
    %506 = vmatpush1.bf16.msra.mxu0 %v483
    %507 = vmatprep.subr.bf16.mxu0 0
    %508 = vmatpush1.bf16.msra.mxu0 %v484
    %509 = vmatprep.subr.bf16.mxu0 0
    %510 = vmatpush1.bf16.msra.mxu0 0
    %511 = vmatprep.subr.bf16.mxu0 0
    %512 = vmatpush1.bf16.msra.mxu0 0
    %513 = vmatprep.subr.bf16.mxu0 0
    %514 = vmatpush1.bf16.msra.mxu0 0
    %515 = vmatprep.subr.bf16.mxu0 0
    %516 = vmatpush1.bf16.msra.mxu0 0
    %517 = vmatprep.subr.bf16.mxu0 0
    %518 = vmatpush1.bf16.msra.mxu0 0
    %519 = vmatprep.subr.bf16.mxu0 0
    %520 = vmatpush1.bf16.msra.mxu0 0
    %521 = vmatprep.subr.bf16.mxu0 0
    %522 = vmatpush1.bf16.msra.mxu0 0
    %523 = vmatprep.subr.bf16.mxu0 0
    %524 = vmatpush1.bf16.msra.mxu0 0
    %525 = vmatprep.mubr.bf16.mxu0 0
    %526 = vmatmul.mubr.bf16.gmra.mrb[0].mxu0 %v309
    %v527 = vpop.f32.mrb[0].mxu0
    %v528 = vadd.f32 %v444, %v527
    %v529 = vpop.f32.mrb[0].mxu0
    %v530 = vpop.f32.mrb[0].mxu0
    %v531 = vpop.f32.mrb[0].mxu0
    %532 = vdwg.mxu0
    %533 = vst [vmem:[#allocation6] sm:$0xff] %v528
    // Predicated region
    $region18: #{condition_encoder_forward.1} parent=1 // pred_check
      _
    $region19: #{condition_encoder_forward.1} parent=1 // pred_check_branch
      %535 = sbr.rel (0) target = $region21
    $region20: #{condition_encoder_forward.1} parent=1 // pred_region
      %s537 = ssub.s32 128, 128
      %538 = vsyncadd [#allocation4], %s537
      %s540 = sshll.u32 [#allocation5], 4
      %s541 = int_to_ptr.vmem [resolvable:$true] %s540
      %543 = dma.vmem_to_hbm [thread:$0]  %s541, 128, %s3, [#allocation4]
    $region21: #{condition_encoder_forward.1} parent=1 // pred_fallthru
      _
    // Predicated region
    $region22: #{condition_encoder_forward.1} parent=1 // pred_check
      _
    $region23: #{condition_encoder_forward.1} parent=1 // pred_check_branch
      %545 = sbr.rel (0) target = $region25
    $region24: #{condition_encoder_forward.1} parent=1 // pred_region
      %s547 = ssub.s32 128, 128
      %548 = vsyncadd [#allocation7], %s547
      %s550 = sshll.u32 [#allocation6], 4
      %s551 = int_to_ptr.vmem [resolvable:$true] %s550
      %553 = dma.vmem_to_hbm [thread:$0]  %s551, 128, %s4, [#allocation7]
    $region25: #{condition_encoder_forward.1} parent=1 // pred_fallthru
      _
    // Predicated region
    $region26: #{condition_encoder_forward.1} parent=1 // pred_check
      _
    $region27: #{condition_encoder_forward.1} parent=1 // pred_check_branch
      %555 = sbr.rel (0) target = $region29
    $region28: #{condition_encoder_forward.1} parent=1 // pred_region
      %556 = dma.done [#allocation4], 128
    $region29: #{condition_encoder_forward.1} parent=1 // pred_fallthru
      _
    // Predicated region
    $region30: #{condition_encoder_forward.1} parent=1 // pred_check
      _
    $region31: #{condition_encoder_forward.1} parent=1 // pred_check_branch
      %558 = sbr.rel (0) target = $region33
    $region32: #{condition_encoder_forward.1} parent=1 // pred_region
      %559 = dma.done [#allocation7], 128
    $region33: #{condition_encoder_forward.1} parent=1 // pred_fallthru
      _
    %560 = vsyncpa [#allocation3], 1
    %561 = vsyncpa [#allocation4], 1
    %562 = vsyncpa [#allocation7], 1

</llo_original>
